<compile_context>
chip_gen: v7x
topology: tpu7x:2x2x1
jax: 0.10.0
libtpu: 0.0.40
codegen_flags: <defaults>
</compile_context>

<pallas_src>
import functools

import jax
import jax.numpy as jnp
from jax.experimental import pallas as pl
from jax.experimental.pallas import tpu as pltpu


# ----------------------------- helpers -------------------------------------

def _round_up(v, m):
    return ((v + m - 1) // m) * m


def _aligned_divisor_tile(total, align, pref):
    """Largest t = align*f such that f divides total//align and t <= max(pref, align)."""
    assert total % align == 0, (total, align)
    q = total // align
    cap = max(pref, align)
    best = 1
    f = 1
    while f * f <= q:
        if q % f == 0:
            for cand in (f, q // f):
                if align * cand <= cap and cand > best:
                    best = cand
        f += 1
    return align * best


def _pick_m_tile(m, pref, align=16):
    """Pick (tm, Mp) minimizing padding: Mp = tm * nblocks, tm a multiple of align."""
    pref = max(pref, align)
    nb = pl.cdiv(m, pref)
    tm = _round_up(pl.cdiv(m, nb), align)
    return tm, tm * nb


def _apply_activation(y, activation):
    if activation is None:
        return y
    if activation == "relu":
        return jnp.maximum(y, 0.0)
    if activation == "tanh":
        return jnp.tanh(y)
    if activation == "gelu":
        return jax.nn.gelu(y)
    raise ValueError(f"unsupported activation: {activation!r}")


def _vmem_capacity_bytes():
    try:
        info = pltpu.get_tpu_info()
        cap = getattr(info, "vmem_capacity_bytes", None)
        if cap:
            return int(cap)
    except Exception:
        pass
    return 64 << 20  # conservative default (v7x per-TC VMEM)


def _reference(x, weight, bias, activation="relu"):
    y = x @ weight.T + bias
    return _apply_activation(y, activation)


# ------------------------------ kernel -------------------------------------

def _block_kernel(x_ref, w_ref, b_ref, o_ref, acc_ref, *, activation):
    # x_ref:   (tm, tk) bf16 row-tile of the input
    # w_ref:   (tk, tn) bf16 tile of the (K, N)-layout prepared weight
    # b_ref:   (1,  tn) f32 bias tile (broadcast over rows)
    # o_ref:   (tm, tn) output tile (lane-dense)
    # acc_ref: (tm, tn) f32 accumulator scratch, resident across the K axis
    prod = jnp.dot(x_ref[...], w_ref[...], preferred_element_type=jnp.float32)

    @pl.when(pl.program_id(2) == 0)
    def _first():
        acc_ref[...] = prod          # no zero-fill pass at k==0

    @pl.when(pl.program_id(2) != 0)
    def _accum():
        acc_ref[...] += prod

    @pl.when(pl.program_id(2) == pl.num_programs(2) - 1)
    def _finalize():
        y = acc_ref[...] + b_ref[...]          # f32 epilogue (v5e-safe)
        y = _apply_activation(y, activation)   # fused on the VPU/EUP
        o_ref[...] = y.astype(o_ref.dtype)


# ------------------------- parameter preparation ---------------------------

def prepare_linear_params(weight, bias, compute_dtype=jnp.bfloat16):
    """One-time parameter prep (run at setup, NOT per forward call):
    PyTorch (out_features, in_features) weight -> (K, N), padded to 128 on
    both dims, cast to the MXU compute dtype.  Bias stays f32 (1, Np)."""
    N, K = weight.shape
    assert bias.shape == (N,), "bias shape mismatch"
    Kp, Np = _round_up(K, 128), _round_up(N, 128)
    w_kn = jnp.pad(weight.astype(compute_dtype).T, ((0, Kp - K), (0, Np - N)))
    b2d = jnp.pad(bias.astype(jnp.float32).reshape(1, N), ((0, 0), (0, Np - N)))
    return w_kn, b2d, N


# ------------------------------ forward ------------------------------------

def block_forward(x, w_kn, b2d, n_out, activation="relu",
                  tile_m=512, tile_n=512, tile_k=1024, out_dtype=None):
    """Pallas equivalent of Block(nn.Linear, ...).forward with prepared params.

    x:     (M, K)   activations (any float dtype; cast to bf16 for the MXU)
    w_kn:  (Kp, Np) prepared weight from prepare_linear_params
    b2d:   (1, Np)  prepared f32 bias
    n_out: true out_features (pre-padding)
    """
    M, K = x.shape
    Kp, Np = w_kn.shape
    assert Kp >= K and Kp % 128 == 0 and Np % 128 == 0
    out_dtype = out_dtype or x.dtype

    tm, Mp = _pick_m_tile(M, tile_m, align=16)        # bf16 sublane-safe
    tk = _aligned_divisor_tile(Kp, 128, tile_k)
    tn = _aligned_divisor_tile(Np, 128, tile_n)

    # Megacore (v7x): make sure at least one "parallel" axis has >= 2 tiles.
    if Mp // tm == 1 and Np // tn == 1 and Np >= 256:
        tn = _aligned_divisor_tile(Np, 128, Np // 2)

    # Per-call x prep: cast to the MXU dtype; only K strictly needs zero
    # padding for the reduction, M padding is minimized by _pick_m_tile.
    x_c = x.astype(w_kn.dtype)
    if (Mp, Kp) != (M, K):
        x_c = jnp.pad(x_c, ((0, Mp - M), (0, Kp - K)))

    grid = (Np // tn, Mp // tm, Kp // tk)

    in_itemsize = jnp.dtype(w_kn.dtype).itemsize
    out_itemsize = jnp.dtype(out_dtype).itemsize
    needed = (2 * tm * tk * in_itemsize       # x tile, double-buffered
              + 2 * tk * tn * in_itemsize     # W tile, double-buffered
              + 2 * 8 * tn * 4                # bias tile (sublane-padded)
              + 2 * tm * tn * out_itemsize    # output tile, double-buffered
              + tm * tn * 4)                  # f32 accumulator scratch
    cap = int(0.75 * _vmem_capacity_bytes())  # ~96 MiB v5e/v6e, ~48 MiB v7x
    vmem_limit = min(max(2 * needed, 16 << 20), cap)
    vmem_limit = max(vmem_limit, needed + (4 << 20))  # never below requirement

    flops = 2 * Mp * Np * Kp
    bytes_accessed = (Mp * Kp * in_itemsize + Kp * Np * in_itemsize
                      + Np * 4 + Mp * Np * out_itemsize)
    transcendentals = Mp * Np if activation in ("tanh", "gelu") else 0

    kernel = functools.partial(_block_kernel, activation=activation)

    out = pl.pallas_call(
        kernel,
        out_shape=jax.ShapeDtypeStruct((Mp, Np), out_dtype),
        grid_spec=pltpu.PrefetchScalarGridSpec(
            num_scalar_prefetch=0,
            grid=grid,
            in_specs=[
                pl.BlockSpec((tm, tk), lambda j, i, k: (i, k)),   # x row tile
                pl.BlockSpec((tk, tn), lambda j, i, k: (k, j)),   # W (K,N) tile
                pl.BlockSpec((1, tn), lambda j, i, k: (0, j)),    # bias tile
            ],
            out_specs=pl.BlockSpec((tm, tn), lambda j, i, k: (i, j)),
            scratch_shapes=[pltpu.VMEM((tm, tn), jnp.float32)],
        ),
        compiler_params=pltpu.CompilerParams(
            dimension_semantics=("parallel", "parallel", "arbitrary"),
            vmem_limit_bytes=int(vmem_limit),
        ),
        cost_estimate=pl.CostEstimate(
            flops=flops,
            bytes_accessed=bytes_accessed,
            transcendentals=transcendentals,
        ),
    )(x_c, w_kn, b2d)

    if (Mp, Np) != (M, n_out):
        out = out[:M, :n_out]
    return out


# Convenience wrapper mirroring Block.forward (prep + call); for real use,
# prepare_linear_params should be hoisted to parameter-setup time.
def block_apply(x, weight, bias, activation="relu", **tile_kwargs):
    w_kn, b2d, n_out = prepare_linear_params(weight, bias)
    return block_forward(x, w_kn, b2d, n_out, activation=activation, **tile_kwargs)


# -------------------------------- demo --------------------------------------

if __name__ == "__main__":
    key = jax.random.PRNGKey(0)

    def make_linear(k, in_f, out_f):
        kw, kb = jax.random.split(k)
        bound = 1.0 / jnp.sqrt(jnp.float32(in_f))
        w = jax.random.uniform(kw, (out_f, in_f), jnp.float32, -bound, bound)
        b = jax.random.uniform(kb, (out_f,), jnp.float32, -bound, bound)
        return w, b

    # --- Case 1: small shape consistent with the module spec ----------------
    k1, k2, key = jax.random.split(key, 3)
    M1, K1, N1 = 8, 32, 128
    x1 = jax.random.normal(k1, (M1, K1), dtype=jnp.float32)
    w1, b1 = make_linear(k2, K1, N1)
    w1p, b1p, n1 = prepare_linear_params(w1, b1)

    out1 = jax.block_until_ready(block_forward(x1, w1p, b1p, n1, activation="relu"))
    ref1 = _reference(x1, w1, b1, "relu")
    assert out1.shape == (M1, N1)
    # bf16 MXU operands (f32 accumulate) => loosened tolerance vs f32 reference
    assert jnp.allclose(out1, ref1, atol=2e-2, rtol=2e-2), "mismatch (case 1)"

    # --- Case 2: ragged M/K/N exercising multi-tile grid + K reduction ------
    k3, k4, key = jax.random.split(key, 3)
    M2, K2, N2 = 260, 320, 384
    x2 = jax.random.normal(k3, (M2, K2), dtype=jnp.float32)
    w2, b2 = make_linear(k4, K2, N2)
    w2p, b2p, n2 = prepare_linear_params(w2, b2)

    out2 = jax.block_until_ready(
        block_forward(x2, w2p, b2p, n2, activation="relu",
                      tile_m=128, tile_n=128, tile_k=128))
    ref2 = _reference(x2, w2, b2, "relu")
    assert out2.shape == (M2, N2)
    assert jnp.allclose(out2, ref2, atol=2e-2, rtol=2e-2), "mismatch (case 2)"

    # --- Case 3: activation=None path (Block with no activation) ------------
    out3 = jax.block_until_ready(block_forward(x1, w1p, b1p, n1, activation=None))
    ref3 = _reference(x1, w1, b1, None)
    assert jnp.allclose(out3, ref3, atol=2e-2, rtol=2e-2), "mismatch (case 3)"

    print("KERNEL_OK")
</pallas_src>

<mosaic_0001>
module attributes {stable_mosaic.version = 11 : i64} {
  func.func @_block_kernel(%arg0: i32, %arg1: i32, %arg2: i32, %arg3: memref<16x128xbf16, #tpu.memory_space<vmem>>, %arg4: memref<128x128xbf16, #tpu.memory_space<vmem>>, %arg5: memref<1x128xf32, #tpu.memory_space<vmem>>, %arg6: memref<16x128xf32, #tpu.memory_space<vmem>>, %arg7: memref<16x128xf32, #tpu.memory_space<vmem>>) attributes {dimension_semantics = [#tpu.dimension_semantics<parallel>, #tpu.dimension_semantics<parallel>, #tpu.dimension_semantics<arbitrary>], iteration_bounds = array<i64: 1, 1, 1>, scalar_prefetch = 0 : i64, scratch_operands = 1 : i64, tpu.core_type = #tpu.core_type<tc>, window_params = [{transform_indices = @transform_0, window_bounds = array<i64: 16, 128>}, {transform_indices = @transform_1, window_bounds = array<i64: 128, 128>}, {transform_indices = @transform_2, window_bounds = array<i64: 1, 128>}, {transform_indices = @transform_3, window_bounds = array<i64: 16, 128>}]} {
    %c0 = arith.constant 0 : index
    %c0_0 = arith.constant 0 : index
    %0 = vector.load %arg3[%c0, %c0_0] : memref<16x128xbf16, #tpu.memory_space<vmem>>, vector<16x128xbf16>
    %c0_1 = arith.constant 0 : index
    %c0_2 = arith.constant 0 : index
    %1 = vector.load %arg4[%c0_1, %c0_2] : memref<128x128xbf16, #tpu.memory_space<vmem>>, vector<128x128xbf16>
    %cst = arith.constant dense<0.000000e+00> : vector<16x128xf32>
    %2 = tpu.matmul %0, %1, %cst {dimension_numbers = #tpu.dot_dimension_numbers<[1], [0], [0], [1], [0, 0, 1, 1], [], []>} : vector<16x128xbf16>, vector<128x128xbf16>, vector<16x128xf32> -> vector<16x128xf32>
    %c0_i32 = arith.constant 0 : i32
    %3 = arith.cmpi eq, %arg2, %c0_i32 : i32
    %4 = arith.extui %3 : i1 to i32
    %c0_i32_3 = arith.constant 0 : i32
    %5 = arith.cmpi ne, %4, %c0_i32_3 : i32
    scf.if %5 {
      %c0_8 = arith.constant 0 : index
      %c0_9 = arith.constant 0 : index
      %12 = vector.load %arg7[%c0_8, %c0_9] : memref<16x128xf32, #tpu.memory_space<vmem>>, vector<16x128xf32>
      tpu.vector_store %arg7[%c0_8, %c0_9], %2 {strides = array<i32>} : memref<16x128xf32, #tpu.memory_space<vmem>>, vector<16x128xf32>,
    } else {
    }
    %c0_i32_4 = arith.constant 0 : i32
    %6 = arith.cmpi ne, %arg2, %c0_i32_4 : i32
    %7 = arith.extui %6 : i1 to i32
    %c0_i32_5 = arith.constant 0 : i32
    %8 = arith.cmpi ne, %7, %c0_i32_5 : i32
    scf.if %8 {
      %c0_8 = arith.constant 0 : index
      %c0_9 = arith.constant 0 : index
      %12 = vector.load %arg7[%c0_8, %c0_9] : memref<16x128xf32, #tpu.memory_space<vmem>>, vector<16x128xf32>
      %13 = arith.addf %12, %2 : vector<16x128xf32>
      %c0_10 = arith.constant 0 : index
      %c0_11 = arith.constant 0 : index
      %14 = vector.load %arg7[%c0_10, %c0_11] : memref<16x128xf32, #tpu.memory_space<vmem>>, vector<16x128xf32>
      tpu.vector_store %arg7[%c0_10, %c0_11], %13 {strides = array<i32>} : memref<16x128xf32, #tpu.memory_space<vmem>>, vector<16x128xf32>,
    } else {
    }
    %c0_i32_6 = arith.constant 0 : i32
    %9 = arith.cmpi eq, %arg2, %c0_i32_6 : i32
    %10 = arith.extui %9 : i1 to i32
    %c0_i32_7 = arith.constant 0 : i32
    %11 = arith.cmpi ne, %10, %c0_i32_7 : i32
    scf.if %11 {
      %c0_8 = arith.constant 0 : index
      %c0_9 = arith.constant 0 : index
      %12 = vector.load %arg7[%c0_8, %c0_9] : memref<16x128xf32, #tpu.memory_space<vmem>>, vector<16x128xf32>
      %c0_10 = arith.constant 0 : index
      %c0_11 = arith.constant 0 : index
      %13 = vector.load %arg5[%c0_10, %c0_11] : memref<1x128xf32, #tpu.memory_space<vmem>>, vector<1x128xf32>
      %14 = vector.broadcast %13 : vector<1x128xf32> to vector<16x128xf32>
      %15 = arith.addf %12, %14 : vector<16x128xf32>
      %cst_12 = arith.constant 0.000000e+00 : f32
      %16 = vector.broadcast %cst_12 : f32 to vector<16x128xf32>
      %17 = arith.maximumf %15, %16 : vector<16x128xf32>
      %c0_13 = arith.constant 0 : index
      %c0_14 = arith.constant 0 : index
      %18 = vector.load %arg6[%c0_13, %c0_14] : memref<16x128xf32, #tpu.memory_space<vmem>>, vector<16x128xf32>
      tpu.vector_store %arg6[%c0_13, %c0_14], %17 {strides = array<i32>} : memref<16x128xf32, #tpu.memory_space<vmem>>, vector<16x128xf32>,
    } else {
    }
    return
  }
  func.func @transform_0(%arg0: i32, %arg1: i32, %arg2: i32) -> (i32, i32) {
    %c0_i32 = arith.constant 0 : i32
    return %arg1, %arg2 : i32, i32
  }
  func.func @transform_1(%arg0: i32, %arg1: i32, %arg2: i32) -> (i32, i32) {
    %c0_i32 = arith.constant 0 : i32
    return %arg2, %arg0 : i32, i32
  }
  func.func @transform_2(%arg0: i32, %arg1: i32, %arg2: i32) -> (i32, i32) {
    %c0_i32 = arith.constant 0 : i32
    %c0_i32_0 = arith.constant 0 : i32
    return %c0_i32, %arg0 : i32, i32
  }
  func.func @transform_3(%arg0: i32, %arg1: i32, %arg2: i32) -> (i32, i32) {
    %c0_i32 = arith.constant 0 : i32
    return %arg1, %arg0 : i32, i32
  }
}

</mosaic_0001>

<llo_original>
// kernel: tpu_custom_call.1
$region0: #{tpu_custom_call.1}
  #allocation0 [shape = 'u32[]', space=smem, size = 0x4, offset = 0x4, fixed_abs, tag = 'smem constant byte address 0x4 - core index']
  #allocation1 [shape = 'u32[144,128]{1,0:T(1,128)}', space=vmem, size = 0x12000, scoped, tag = 'internal scratch']
  #allocation2 [shape = 'f32[16,128]{1,0:T(8,128)}', space=vmem, size = 0x2000, scoped, tag = 'scratch operand']
  %s0 = inlined_call_operand.hbm [shape: bf16[16,128], index: 0, kind: input, shape index: {}]
  %s1 = inlined_call_operand.hbm [shape: bf16[128,128], index: 1, kind: input, shape index: {}]
  %s2 = inlined_call_operand.vmem [shape: f32[1,128], index: 2, kind: input, shape index: {}]
  %s3 = inlined_call_operand.hbm [shape: f32[16,128], index: 3, kind: output, shape index: {}]
  %s4 = sld [smem:[#allocation0]]
  $region42: #{tpu_custom_call.1} parent=0
    _
  %s6 = ssub.s32 1, %s4
  %s7 = scalar_select 0, %s6, %s4
  $region1: #{tpu_custom_call.1} parent=0
    #allocation3 [shape = 'u8[4096]{0}', space=vmem, size = 0x1000, scoped, tag = 'input window, operand 0, single buffered']
    #allocation4 [shape = 's32[1]{0}', space=sflag, size = 0x4, scoped, tag = 'scoped memory for tpu_custom_call.1']
    #allocation5 [shape = 's32[1]{0}', space=sflag, size = 0x4, scoped, tag = 'scoped memory for tpu_custom_call.1']
    #allocation6 [shape = 'u8[32768]{0}', space=vmem, size = 0x8000, scoped, tag = 'input window, operand 1, single buffered']
    #allocation7 [shape = 's32[1]{0}', space=sflag, size = 0x4, scoped, tag = 'scoped memory for tpu_custom_call.1']
    #allocation8 [shape = 'u8[8192]{0}', space=vmem, size = 0x2000, scoped, tag = 'output window, operand 0, single buffered']
    %8 = vsyncpa [#allocation4], 0
    %9 = vsyncpa [#allocation7], 0
    %10 = vsyncpa [#allocation5], 0
    // Predicated region
    $region2: #{tpu_custom_call.1} parent=1 // pred_check
      _
    $region3: #{tpu_custom_call.1} parent=1 // pred_check_branch
      %12 = sbr.rel (0) target = $region5
    $region4: #{tpu_custom_call.1} parent=1 // pred_region
      %s14 = ssub.s32 128, 128
      %15 = vsyncadd [#allocation4], %s14
      %s16 = sshll.u32 [#allocation3], 4
      %s17 = int_to_ptr.vmem [resolvable:$true] %s16
      %22 = dma.hbm_to_vmem [thread:$0]  %s0, 128, %s17, [#allocation4], 64, 64, 4
    $region5: #{tpu_custom_call.1} parent=1 // pred_fallthru
      _
    // Predicated region
    $region6: #{tpu_custom_call.1} parent=1 // pred_check
      _
    $region7: #{tpu_custom_call.1} parent=1 // pred_check_branch
      %24 = sbr.rel (0) target = $region9
    $region8: #{tpu_custom_call.1} parent=1 // pred_region
      %s26 = ssub.s32 1024, 1024
      %27 = vsyncadd [#allocation7], %s26
      %s28 = sshll.u32 [#allocation6], 4
      %s29 = int_to_ptr.vmem [resolvable:$true] %s28
      %34 = dma.hbm_to_vmem [thread:$0]  %s1, 1024, %s29, [#allocation7], 64, 64, 4
    $region9: #{tpu_custom_call.1} parent=1 // pred_fallthru
      _
    // Predicated region
    $region10: #{tpu_custom_call.1} parent=1 // pred_check
      _
    $region11: #{tpu_custom_call.1} parent=1 // pred_check_branch
      %36 = sbr.rel (0) target = $region13
    $region12: #{tpu_custom_call.1} parent=1 // pred_region
      _
    $region13: #{tpu_custom_call.1} parent=1 // pred_fallthru
      _
    // Predicated region
    $region14: #{tpu_custom_call.1} parent=1 // pred_check
      _
    $region15: #{tpu_custom_call.1} parent=1 // pred_check_branch
      %38 = sbr.rel (0) target = $region17
    $region16: #{tpu_custom_call.1} parent=1 // pred_region
      %39 = dma.done [#allocation4], 128
    $region17: #{tpu_custom_call.1} parent=1 // pred_fallthru
      _
    // Predicated region
    $region18: #{tpu_custom_call.1} parent=1 // pred_check
      _
    $region19: #{tpu_custom_call.1} parent=1 // pred_check_branch
      %41 = sbr.rel (0) target = $region21
    $region20: #{tpu_custom_call.1} parent=1 // pred_region
      %42 = dma.done [#allocation7], 1024
    $region21: #{tpu_custom_call.1} parent=1 // pred_fallthru
      _
    %v44 = vld [vmem:[#allocation3] sm:$0xf]
    %v45 = vld [vmem:[#allocation3 + $0x4] sm:$0xf]
    %v46 = vld [vmem:[#allocation6] sm:$0xf]
    %v47 = vld [vmem:[#allocation6 + $0x4] sm:$0xf]
    %v48 = vld [vmem:[#allocation6 + $0x8] sm:$0xf]
    %v49 = vld [vmem:[#allocation6 + $0xc] sm:$0xf]
    %v50 = vld [vmem:[#allocation6 + $0x10] sm:$0xf]
    %v51 = vld [vmem:[#allocation6 + $0x14] sm:$0xf]
    %v52 = vld [vmem:[#allocation6 + $0x18] sm:$0xf]
    %v53 = vld [vmem:[#allocation6 + $0x1c] sm:$0xf]
    %v54 = vld [vmem:[#allocation6 + $0x20] sm:$0xf]
    %v55 = vld [vmem:[#allocation6 + $0x24] sm:$0xf]
    %v56 = vld [vmem:[#allocation6 + $0x28] sm:$0xf]
    %v57 = vld [vmem:[#allocation6 + $0x2c] sm:$0xf]
    %v58 = vld [vmem:[#allocation6 + $0x30] sm:$0xf]
    %v59 = vld [vmem:[#allocation6 + $0x34] sm:$0xf]
    %v60 = vld [vmem:[#allocation6 + $0x38] sm:$0xf]
    %v61 = vld [vmem:[#allocation6 + $0x3c] sm:$0xf]
    %v64 = vunpack.c.l.b16 %v44
    %v65 = vunpack.c.l.b16 %v45
    %v66 = vpack.c.b16 %v65, %v64
    %v84 = vunpack.c.l.b16 %v46
    %v85 = vunpack.c.l.b16 %v47
    %v86 = vunpack.c.l.b16 %v48
    %v87 = vunpack.c.l.b16 %v49
    %v88 = vunpack.c.l.b16 %v50
    %v89 = vunpack.c.l.b16 %v51
    %v90 = vunpack.c.l.b16 %v52
    %v91 = vunpack.c.l.b16 %v53
    %v92 = vunpack.c.l.b16 %v54
    %v93 = vunpack.c.l.b16 %v55
    %v94 = vunpack.c.l.b16 %v56
    %v95 = vunpack.c.l.b16 %v57
    %v96 = vunpack.c.l.b16 %v58
    %v97 = vunpack.c.l.b16 %v59
    %v98 = vunpack.c.l.b16 %v60
    %v99 = vunpack.c.l.b16 %v61
    %v100 = vpack.c.b16 %v85, %v84
    %v101 = vpack.c.b16 %v87, %v86
    %v102 = vpack.c.b16 %v89, %v88
    %v103 = vpack.c.b16 %v91, %v90
    %v104 = vpack.c.b16 %v93, %v92
    %v105 = vpack.c.b16 %v95, %v94
    %v106 = vpack.c.b16 %v97, %v96
    %v107 = vpack.c.b16 %v99, %v98
    %116 = vmatprep.subr.bf16.mxu0 0
    %117 = vmatpush1.bf16.msra.mxu0 %v100
    %118 = vmatprep.subr.bf16.mxu0 0
    %119 = vmatpush1.bf16.msra.mxu0 %v101
    %120 = vmatprep.subr.bf16.mxu0 0
    %121 = vmatpush1.bf16.msra.mxu0 %v102
    %122 = vmatprep.subr.bf16.mxu0 0
    %123 = vmatpush1.bf16.msra.mxu0 %v103
    %124 = vmatprep.subr.bf16.mxu0 0
    %125 = vmatpush1.bf16.msra.mxu0 %v104
    %126 = vmatprep.subr.bf16.mxu0 0
    %127 = vmatpush1.bf16.msra.mxu0 %v105
    %128 = vmatprep.subr.bf16.mxu0 0
    %129 = vmatpush1.bf16.msra.mxu0 %v106
    %130 = vmatprep.subr.bf16.mxu0 0
    %131 = vmatpush1.bf16.msra.mxu0 %v107
    %132 = vmatprep.subr.bf16.mxu0 0
    %133 = vmatpush1.bf16.msra.mxu0 0
    %134 = vmatprep.subr.bf16.mxu0 0
    %135 = vmatpush1.bf16.msra.mxu0 0
    %136 = vmatprep.subr.bf16.mxu0 0
    %137 = vmatpush1.bf16.msra.mxu0 0
    %138 = vmatprep.subr.bf16.mxu0 0
    %139 = vmatpush1.bf16.msra.mxu0 0
    %140 = vmatprep.subr.bf16.mxu0 0
    %141 = vmatpush1.bf16.msra.mxu0 0
    %142 = vmatprep.subr.bf16.mxu0 0
    %143 = vmatpush1.bf16.msra.mxu0 0
    %144 = vmatprep.subr.bf16.mxu0 0
    %145 = vmatpush1.bf16.msra.mxu0 0
    %146 = vmatprep.subr.bf16.mxu0 0
    %147 = vmatpush1.bf16.msra.mxu0 0
    %148 = vmatprep.mubr.bf16.mxu0 0
    %149 = vmatmul.mubr.bf16.gmra.mrb[0].mxu0 %v66
    %v150 = vpop.f32.mrb[0].mxu0
    %v151 = vadd.f32 0.0, %v150
    %v152 = vpop.f32.mrb[0].mxu0
    %v153 = vpop.f32.mrb[0].mxu0
    %v154 = vadd.f32 0.0, %v153
    %v155 = vpop.f32.mrb[0].mxu0
    %156 = vdwg.mxu0
    %p157 = scmp.eq.s32.totalorder 0, 0
    // Predicated region
    $region22: #{tpu_custom_call.1} parent=1 // pred_check
      %p158 = pneg %p157
    $region23: #{tpu_custom_call.1} parent=1 // pred_check_branch
      %160 = sbr.rel (%p158) target = $region25
    $region24: #{tpu_custom_call.1} parent=1 // pred_region
      %161 = vst [vmem:[#allocation2] sm:$0xff] %v151
      %162 = vst [vmem:[#allocation2 + $0x8] sm:$0xff] %v154
    $region25: #{tpu_custom_call.1} parent=1 // pred_fallthru
      _
    %p163 = scmp.ne.s32.totalorder 0, 0
    // Predicated region
    $region26: #{tpu_custom_call.1} parent=1 // pred_check
      %p164 = pneg %p163
    $region27: #{tpu_custom_call.1} parent=1 // pred_check_branch
      %166 = sbr.rel (%p164) target = $region29
    $region28: #{tpu_custom_call.1} parent=1 // pred_region
      %v167 = vld [vmem:[#allocation2] sm:$0xff]
      %v168 = vld [vmem:[#allocation2 + $0x8] sm:$0xff]
      %v169 = vadd.f32 %v167, %v151
      %v170 = vadd.f32 %v168, %v154
      %171 = vst [vmem:[#allocation2] sm:$0xff] %v169
      %172 = vst [vmem:[#allocation2 + $0x8] sm:$0xff] %v170
    $region29: #{tpu_custom_call.1} parent=1 // pred_fallthru
      _
    // Predicated region
    $region30: #{tpu_custom_call.1} parent=1 // pred_check
      %p173 = pneg %p157
    $region31: #{tpu_custom_call.1} parent=1 // pred_check_branch
      %175 = sbr.rel (%p173) target = $region33
    $region32: #{tpu_custom_call.1} parent=1 // pred_region
      %v176 = vld [vmem:[#allocation2] sm:$0xff]
      %v177 = vld [vmem:[#allocation2 + $0x8] sm:$0xff]
      %v178 = vld [vmem:[%s2] sm:$0x1]
      %v180 = vlaneseq
      %v181 = vshrl.u32 %v180, 7
      %v182 = vsub.s32 0, %v181
      %v183 = vrot.slane %v178, %v182
      %v185 = vadd.f32 %v176, %v183
      %v186 = vadd.f32 %v177, %v183
      %v187 = vmax.f32 %v185, 0.0
      %v188 = vmax.f32 %v186, 0.0
      %189 = vst [vmem:[#allocation8] sm:$0xff] %v187
      %190 = vst [vmem:[#allocation8 + $0x8] sm:$0xff] %v188
    $region33: #{tpu_custom_call.1} parent=1 // pred_fallthru
      _
    // Predicated region
    $region34: #{tpu_custom_call.1} parent=1 // pred_check
      _
    $region35: #{tpu_custom_call.1} parent=1 // pred_check_branch
      %192 = sbr.rel (0) target = $region37
    $region36: #{tpu_custom_call.1} parent=1 // pred_region
      %s194 = ssub.s32 256, 256
      %195 = vsyncadd [#allocation5], %s194
      %s196 = sshll.u32 [#allocation8], 4
      %s197 = int_to_ptr.vmem [resolvable:$true] %s196
      %202 = dma.vmem_to_hbm [thread:$0]  %s197, 256, %s3, [#allocation5], 128, 128, 8
    $region37: #{tpu_custom_call.1} parent=1 // pred_fallthru
      _
    // Predicated region
    $region38: #{tpu_custom_call.1} parent=1 // pred_check
      _
    $region39: #{tpu_custom_call.1} parent=1 // pred_check_branch
      %204 = sbr.rel (0) target = $region41
    $region40: #{tpu_custom_call.1} parent=1 // pred_region
      %205 = dma.done [#allocation5], 256
    $region41: #{tpu_custom_call.1} parent=1 // pred_fallthru
      _
    %206 = vsyncpa [#allocation4], 1
    %207 = vsyncpa [#allocation7], 1
    %208 = vsyncpa [#allocation5], 1

</llo_original>
